<compile_context>
chip_gen: v6e
topology: v6e:2x2x1
jax: 0.10.0
libtpu: 0.0.40
codegen_flags: <defaults>
</compile_context>

<pallas_src>
import functools

import jax
import jax.numpy as jnp
from jax import lax
from jax.experimental import pallas as pl
from jax.experimental.pallas import tpu as pltpu

LANE = 128


def _timeout_kernel(st_ref, du_ref, x_ref, o_ref, *, n_timeout, tile):
    """st_ref/du_ref: (n_timeout,) int32 in SMEM; x_ref/o_ref: (B, tile)."""
    t0 = pl.program_id(0) * tile
    # Absolute time index of every element in this block (2-D iota, lane axis).
    t_idx = lax.broadcasted_iota(jnp.int32, x_ref.shape, dimension=1) + t0

    zero_mask = jnp.zeros(x_ref.shape, jnp.bool_)
    for j in range(n_timeout):                       # static, fully unrolled
        st = st_ref[j]
        du = du_ref[j]                               # du == st  =>  no-op round
        zero_mask = jnp.logical_or(
            zero_mask, jnp.logical_and(t_idx >= st, t_idx < du))

    x = x_ref[...]
    o_ref[...] = jnp.where(zero_mask, jnp.zeros_like(x), x)


def draw_intervals(key, seq_len, n_timeout, max_timestamp, prob):
    """Plain-JAX glue reproducing TimeOut's per-round scalar randomness.

    Rounds that are skipped (rand > prob) get an empty interval (du == st),
    which makes the in-kernel application branch-free.
    """
    k_apply, k_st, k_dur = jax.random.split(key, 3)
    applied = jax.random.uniform(k_apply, (n_timeout,)) <= prob
    st = jax.random.randint(k_st, (n_timeout,), 0,
                            seq_len - max_timestamp + 1, dtype=jnp.int32)
    dur = jax.random.randint(k_dur, (n_timeout,), 0,
                             max_timestamp, dtype=jnp.int32)
    du = jnp.where(applied, st + dur, st).astype(jnp.int32)
    return st, du


def apply_time_out(x, st, du, *, tile=512):
    """Zero x[:, st[j]:du[j]] for every interval j, via a Pallas kernel."""
    B, T = x.shape
    n_timeout = st.shape[0]

    # Lane-dense tiles; prefer >= 2 grid steps so v7x can use both TCs.
    tile = max(LANE, min(tile, pl.cdiv(T, 2 * LANE) * LANE))
    g = pl.cdiv(T, tile)
    T_pad = g * tile
    xp = jnp.pad(x, ((0, 0), (0, T_pad - T))) if T_pad != T else x

    out = pl.pallas_call(
        functools.partial(_timeout_kernel, n_timeout=n_timeout, tile=tile),
        out_shape=jax.ShapeDtypeStruct((B, T_pad), x.dtype),
        grid_spec=pltpu.PrefetchScalarGridSpec(
            num_scalar_prefetch=2,                       # st, du -> SMEM
            grid=(g,),
            in_specs=[pl.BlockSpec((B, tile), lambda i, st, du: (0, i))],
            out_specs=pl.BlockSpec((B, tile), lambda i, st, du: (0, i)),
        ),
        compiler_params=pltpu.CompilerParams(
            dimension_semantics=("parallel",)),
    )(st, du, xp)

    return out[:, :T]


def time_out_forward(x, key, *, n_timeout, max_timestamp, prob=0.5, tile=512):
    """TimeOut.forward equivalent (randomness driven by `key`)."""
    assert x.shape[1] >= max_timestamp
    st, du = draw_intervals(key, x.shape[1], n_timeout, max_timestamp, prob)
    return apply_time_out(x, st, du, tile=tile)


if __name__ == "__main__":
    key = jax.random.PRNGKey(0)
    k_data, k_transform = jax.random.split(key)

    B, T = 2, 1024                  # x: (batch, time)
    n_timeout, max_timestamp, prob = 3, 128, 0.5
    x = jax.random.normal(k_data, (B, T), dtype=jnp.float32)

    y = jax.block_until_ready(
        time_out_forward(x, k_transform, n_timeout=n_timeout,
                         max_timestamp=max_timestamp, prob=prob))

    # Pure-JAX reference using the identical interval draws.
    st, du = draw_intervals(k_transform, T, n_timeout, max_timestamp, prob)
    t = jnp.arange(T)
    mask = jnp.zeros((T,), jnp.bool_)
    for j in range(n_timeout):
        mask = mask | ((t >= st[j]) & (t < du[j]))
    y_ref = jnp.where(mask[None, :], jnp.zeros_like(x), x)

    assert y.shape == (B, T)
    assert jnp.array_equal(y, y_ref), "Pallas TimeOut mismatch vs reference"

    print("KERNEL_OK")
</pallas_src>

<mosaic_0001>
module attributes {stable_mosaic.version = 11 : i64} {
  func.func @_timeout_kernel(%arg0: i32, %arg1: memref<3xi32, #tpu.memory_space<smem>>, %arg2: memref<3xi32, #tpu.memory_space<smem>>, %arg3: memref<2x512xf32, #tpu.memory_space<vmem>>, %arg4: memref<2x512xf32, #tpu.memory_space<vmem>>) attributes {dimension_semantics = [#tpu.dimension_semantics<parallel>], iteration_bounds = array<i64: 2>, scalar_prefetch = 2 : i64, scratch_operands = 0 : i64, tpu.core_type = #tpu.core_type<tc>, window_params = [{transform_indices = @transform_0, window_bounds = array<i64: 2, 512>}, {transform_indices = @transform_1, window_bounds = array<i64: 2, 512>}]} {
    %c512_i32 = arith.constant 512 : i32
    %0 = arith.muli %arg0, %c512_i32 : i32
    %1 = tpu.iota {dimensions = array<i32: 1>} : vector<2x512xi32>
    %2 = vector.broadcast %0 : i32 to vector<2x512xi32>
    %3 = arith.addi %1, %2 : vector<2x512xi32>
    %false = arith.constant false
    %4 = vector.broadcast %false : i1 to vector<2x512xi1>
    %c0 = arith.constant 0 : index
    %5 = memref.load %arg1[%c0] : memref<3xi32, #tpu.memory_space<smem>>
    %c0_0 = arith.constant 0 : index
    %6 = memref.load %arg2[%c0_0] : memref<3xi32, #tpu.memory_space<smem>>
    %7 = vector.broadcast %5 : i32 to vector<2x512xi32>
    %8 = arith.cmpi sge, %3, %7 : vector<2x512xi32>
    %9 = vector.broadcast %6 : i32 to vector<2x512xi32>
    %10 = arith.cmpi slt, %3, %9 : vector<2x512xi32>
    %11 = arith.andi %8, %10 : vector<2x512xi1>
    %12 = arith.ori %4, %11 : vector<2x512xi1>
    %c1 = arith.constant 1 : index
    %13 = memref.load %arg1[%c1] : memref<3xi32, #tpu.memory_space<smem>>
    %c1_1 = arith.constant 1 : index
    %14 = memref.load %arg2[%c1_1] : memref<3xi32, #tpu.memory_space<smem>>
    %15 = vector.broadcast %13 : i32 to vector<2x512xi32>
    %16 = arith.cmpi sge, %3, %15 : vector<2x512xi32>
    %17 = vector.broadcast %14 : i32 to vector<2x512xi32>
    %18 = arith.cmpi slt, %3, %17 : vector<2x512xi32>
    %19 = arith.andi %16, %18 : vector<2x512xi1>
    %20 = arith.ori %12, %19 : vector<2x512xi1>
    %c2 = arith.constant 2 : index
    %21 = memref.load %arg1[%c2] : memref<3xi32, #tpu.memory_space<smem>>
    %c2_2 = arith.constant 2 : index
    %22 = memref.load %arg2[%c2_2] : memref<3xi32, #tpu.memory_space<smem>>
    %23 = vector.broadcast %21 : i32 to vector<2x512xi32>
    %24 = arith.cmpi sge, %3, %23 : vector<2x512xi32>
    %25 = vector.broadcast %22 : i32 to vector<2x512xi32>
    %26 = arith.cmpi slt, %3, %25 : vector<2x512xi32>
    %27 = arith.andi %24, %26 : vector<2x512xi1>
    %28 = arith.ori %20, %27 : vector<2x512xi1>
    %c0_3 = arith.constant 0 : index
    %c0_4 = arith.constant 0 : index
    %29 = vector.load %arg3[%c0_3, %c0_4] : memref<2x512xf32, #tpu.memory_space<vmem>>, vector<2x512xf32>
    %cst = arith.constant 0.000000e+00 : f32
    %30 = vector.broadcast %cst : f32 to vector<2x512xf32>
    %31 = arith.select %28, %30, %29 : vector<2x512xi1>, vector<2x512xf32>
    %c0_5 = arith.constant 0 : index
    %c0_6 = arith.constant 0 : index
    %32 = vector.load %arg4[%c0_5, %c0_6] : memref<2x512xf32, #tpu.memory_space<vmem>>, vector<2x512xf32>
    tpu.vector_store %arg4[%c0_5, %c0_6], %31 {strides = array<i32>} : memref<2x512xf32, #tpu.memory_space<vmem>>, vector<2x512xf32>,
    return
  }
  func.func @transform_0(%arg0: i32, %arg1: memref<3xi32, #tpu.memory_space<smem>>, %arg2: memref<3xi32, #tpu.memory_space<smem>>) -> (i32, i32) {
    %c0_i32 = arith.constant 0 : i32
    %c0_i32_0 = arith.constant 0 : i32
    return %c0_i32, %arg0 : i32, i32
  }
  func.func @transform_1(%arg0: i32, %arg1: memref<3xi32, #tpu.memory_space<smem>>, %arg2: memref<3xi32, #tpu.memory_space<smem>>) -> (i32, i32) {
    %c0_i32 = arith.constant 0 : i32
    %c0_i32_0 = arith.constant 0 : i32
    return %c0_i32, %arg0 : i32, i32
  }
}

</mosaic_0001>

<llo_original>
// kernel: tpu_custom_call.1
$region0: #{tpu_custom_call.1}
  #allocation0 [shape = 'u32[]', space=smem, size = 0x4, offset = 0x4, fixed_abs, tag = 'smem constant byte address 0x4 - core index']
  #allocation1 [shape = 'u32[144,128]{1,0:T(1,128)}', space=vmem, size = 0x12000, scoped, tag = 'internal scratch']
  #allocation2 [shape = 's32[1]{0}', space=sflag, size = 0x4, scoped, tag = 'scoped memory for tpu_custom_call.1']
  #allocation3 [shape = 'u8[512]{0}', space=smem, size = 0x200, scoped, tag = 'prefetched SMEM operand 0']
  #allocation4 [shape = 'u8[512]{0}', space=smem, size = 0x200, scoped, tag = 'prefetched SMEM operand 1']
  %s0 = inlined_call_operand.hbm [shape: s32[3], index: 0, kind: input, shape index: {}]
  %s1 = inlined_call_operand.vmem [shape: s32[3], index: 1, kind: input, shape index: {}]
  %s2 = inlined_call_operand.hbm [shape: f32[2,1024], index: 2, kind: input, shape index: {}]
  %s3 = inlined_call_operand.hbm [shape: f32[2,1024], index: 3, kind: output, shape index: {}]
  %s4 = sld [smem:[#allocation0]]
  $region41: #{tpu_custom_call.1} parent=0
    _
  %s6 = ssub.s32 1, %s4
  %s7 = scalar_select 0, %s6, %s4
  %9 = dma.hbm_to_smem %s0, 16, [#allocation3], [#allocation2]
  %s10 = sshll.u32 %s1, 4
  %s11 = int_to_ptr.vmem [resolvable:$true] %s10
  %13 = dma.vmem_to_smem %s11, 16, [#allocation4], [#allocation2]
  %14 = dma.done [#allocation2], 32
  %15 = sfence
  $region1: #{tpu_custom_call.1} parent=0
    #allocation5 [shape = 'u8[8192]{0}', space=vmem, size = 0x2000, scoped, tag = 'input window, operand 2']
    #allocation6 [shape = 's32[2]{0}', space=sflag, size = 0x8, scoped, tag = 'scoped memory for tpu_custom_call.1']
    #allocation7 [shape = 's32[2]{0}', space=sflag, size = 0x8, scoped, tag = 'scoped memory for tpu_custom_call.1']
    #allocation8 [shape = 'u8[8192]{0}', space=vmem, size = 0x2000, scoped, tag = 'output window, operand 0']
    %16 = vsyncpa [#allocation6], 0
    %s17 = scalar_lea.sflag [#allocation6], 1
    %18 = vsyncpa %s17, 0
    %19 = vsyncpa [#allocation7], 0
    %s20 = scalar_lea.sflag [#allocation7], 1
    %21 = vsyncpa %s20, 0
    loop: start=0, step=1, limit=4
    $region2: #{tpu_custom_call.1} parent=1 // loop_pre_header
      _
    $region3: #{tpu_custom_call.1} parent=1 // loop_header
      %s23 = sphi 0, %s27
      %p24 = scmp.ge.s32.totalorder %s23, 4
      %s33 = sphi 0, %s35
      %s36 = sphi 0, %s33
      %s37 = sphi 0, %s36
      %s53 = sphi 0, %s37
      %s59 = sphi 0, %s61
      %s62 = sphi 0, %s59
      %s63 = sphi 0, %s62
      %s79 = sphi 0, %s63
    $region4: #{tpu_custom_call.1} parent=1 // loop_header_branch
      %26 = sbr.rel (%p24) target = $region8
    $region5: #{tpu_custom_call.1} parent=1 // loop_body
      %s28 = ssub.s32 %s23, 1
      %s29 = ssub.s32 %s23, 2
      %s30 = sadd.s32 %s23, 1
      %s31 = ssub.s32 %s23, %s30
      %p32 = scmp.eq.s32.totalorder %s31, 0
      %s34 = sadd.s32 %s33, 1
      %s35 = scalar_select %p32, %s33, %s34
      %p38 = pneg %p32
      %p39 = scmp.eq.s32.totalorder %s23, 1
      %p40 = por %p38, %p39
      %p41 = scmp.ne.s32.totalorder %s33, %s36
      %p42 = scmp.eq.s32.totalorder %s23, 0
      %p43 = por %p41, %p42
      %p44 = scmp.ne.s32.totalorder %s33, %s36
      %p45 = scmp.eq.s32.totalorder %s28, 1
      %p46 = por %p44, %p45
      %p47 = scmp.ne.s32.totalorder %s36, %s37
      %p48 = scmp.eq.s32.totalorder %s28, 0
      %p49 = por %p47, %p48
      %p50 = scmp.ne.s32.totalorder %s36, %s37
      %p51 = scmp.eq.s32.totalorder %s29, 1
      %p52 = por %p50, %p51
      %p54 = scmp.ne.s32.totalorder %s37, %s53
      %p55 = scmp.eq.s32.totalorder %s29, 0
      %p56 = por %p54, %p55
      %s57 = ssub.s32 %s23, %s30
      %p58 = scmp.eq.s32.totalorder %s57, 0
      %s60 = sadd.s32 %s59, 1
      %s61 = scalar_select %p58, %s59, %s60
      %p64 = pneg %p58
      %p65 = scmp.eq.s32.totalorder %s23, 1
      %p66 = por %p64, %p65
      %p67 = scmp.ne.s32.totalorder %s59, %s62
      %p68 = scmp.eq.s32.totalorder %s23, 0
      %p69 = por %p67, %p68
      %p70 = scmp.ne.s32.totalorder %s59, %s62
      %p71 = scmp.eq.s32.totalorder %s28, 1
      %p72 = por %p70, %p71
      %p73 = scmp.ne.s32.totalorder %s62, %s63
      %p74 = scmp.eq.s32.totalorder %s28, 0
      %p75 = por %p73, %p74
      %p76 = scmp.ne.s32.totalorder %s62, %s63
      %p77 = scmp.eq.s32.totalorder %s29, 1
      %p78 = por %p76, %p77
      %p80 = scmp.ne.s32.totalorder %s63, %s79
      %p81 = scmp.eq.s32.totalorder %s29, 0
      %p82 = por %p80, %p81
      %p83 = scmp.le.s32.totalorder 1, %s23
      %p84 = scmp.lt.s32.totalorder %s23, 3
      %p85 = pnand %p83, %p84
      %p86 = pneg %p85
      // Predicated region
      $region9: #{tpu_custom_call.1} parent=5 // pred_check
        _
      $region10: #{tpu_custom_call.1} parent=5 // pred_check_branch
        %88 = sbr.rel (%p85) target = $region12
      $region11: #{tpu_custom_call.1} parent=5 // pred_region
        %s89 = ssub.s32 %s23, 1
      $region12: #{tpu_custom_call.1} parent=5 // pred_fallthru
        _
      %p90 = scmp.lt.s32.totalorder %s23, 2
      // Predicated region
      $region13: #{tpu_custom_call.1} parent=5 // pred_check
        %p91 = pneg %p90
      $region14: #{tpu_custom_call.1} parent=5 // pred_check_branch
        %93 = sbr.rel (%p91) target = $region16
      $region15: #{tpu_custom_call.1} parent=5 // pred_region
        // Predicated region
        $region17: #{tpu_custom_call.1} parent=15 // pred_check
          %p94 = pneg %p43
        $region18: #{tpu_custom_call.1} parent=15 // pred_check_branch
          %96 = sbr.rel (%p94) target = $region20
        $region19: #{tpu_custom_call.1} parent=15 // pred_region
          %s97 = sand.u32 %s33, 1
          %s98 = scalar_lea.sflag [#allocation6], %s97
          %s99 = sand.u32 %s33, 1
          %s100 = smul.addr %s99, 8
          %s101 = scalar_lea.vmem [#allocation5], %s100
          %s102 = smul.u32 4, %s23
          %s104 = ssub.s32 128, 128
          %105 = vsyncadd %s98, %s104
          %s106 = smul.addr %s102, 32
          %s107 = scalar_lea.hbm %s2, %s106
          %s109 = sshll.u32 %s101, 4
          %s110 = int_to_ptr.vmem [resolvable:$true] %s109
          %112 = dma.hbm_to_vmem [thread:$0]  %s107, 128, %s110, %s98
        $region20: #{tpu_custom_call.1} parent=15 // pred_fallthru
          _
      $region16: #{tpu_custom_call.1} parent=5 // pred_fallthru
        _
      %p113 = scmp.le.s32.totalorder 1, %s23
      %p114 = scmp.lt.s32.totalorder %s23, 3
      %p115 = pnand %p113, %p114
      %p116 = pneg %p115
      // Predicated region
      $region21: #{tpu_custom_call.1} parent=5 // pred_check
        _
      $region22: #{tpu_custom_call.1} parent=5 // pred_check_branch
        %118 = sbr.rel (%p115) target = $region24
      $region23: #{tpu_custom_call.1} parent=5 // pred_region
        %s119 = ssub.s32 %s23, 1
        %s120 = sand.u32 %s36, 1
        %s121 = scalar_lea.sflag [#allocation6], %s120
        %s122 = sand.u32 %s36, 1
        %s123 = smul.addr %s122, 8
        %s124 = scalar_lea.vmem [#allocation5], %s123
        // Predicated region
        $region25: #{tpu_custom_call.1} parent=23 // pred_check
          %p125 = pneg %p49
        $region26: #{tpu_custom_call.1} parent=23 // pred_check_branch
          %127 = sbr.rel (%p125) target = $region28
        $region27: #{tpu_custom_call.1} parent=23 // pred_region
          %128 = dma.done %s121, 128
        $region28: #{tpu_custom_call.1} parent=23 // pred_fallthru
          _
        %s129 = sand.u32 %s36, 1
        %s130 = scalar_lea.sflag [#allocation6], %s129
        %s131 = sand.u32 %s36, 1
        %s132 = smul.addr %s131, 8
        %s133 = scalar_lea.vmem [#allocation5], %s132
        %p134 = pneg %p49
        %p135 = pneg %p46
        %p136 = pneg %p75
        %p137 = pneg %p72
        %s138 = sand.u32 %s62, 1
        %s139 = scalar_lea.sflag [#allocation7], %s138
        %s140 = sand.u32 %s62, 1
        %s141 = smul.addr %s140, 8
        %s142 = scalar_lea.vmem [#allocation8], %s141
        %s143 = smul.u32 4, %s28
        %s144 = smul.u32 4, %s28
        %s145 = smul.u32 %s28, 512
        %v146 = vlaneseq
        %v147 = vand.u32 %v146, 127
        %v148 = vadd.s32 %v147, 128
        %v149 = vadd.s32 %v147, 256
        %v150 = vadd.s32 %v147, 384
        %v151 = vstv %s145
        %v152 = vadd.s32 %v147, %v151
        %v153 = vadd.s32 %v148, %v151
        %v154 = vadd.s32 %v149, %v151
        %v155 = vadd.s32 %v150, %v151
        %s156 = sld [smem:[#allocation3]]
        %s157 = sld [smem:[#allocation4]]
        %v158 = vstv %s156
        %vm159 = vcmp.ge.s32.totalorder %v152, %v158
        %vm160 = vcmp.ge.s32.totalorder %v153, %v158
        %vm161 = vcmp.ge.s32.totalorder %v154, %v158
        %vm162 = vcmp.ge.s32.totalorder %v155, %v158
        %v163 = vstv %s157
        %vm164 = vcmp.lt.s32.totalorder %v152, %v163
        %vm165 = vcmp.lt.s32.totalorder %v153, %v163
        %vm166 = vcmp.lt.s32.totalorder %v154, %v163
        %vm167 = vcmp.lt.s32.totalorder %v155, %v163
        %vm168 = vmand %vm159, %vm164
        %vm169 = vmand %vm160, %vm165
        %vm170 = vmand %vm161, %vm166
        %vm171 = vmand %vm162, %vm167
        %s172 = sld [smem:[#allocation3 + $0x1]]
        %s173 = sld [smem:[#allocation4 + $0x1]]
        %v174 = vstv %s172
        %vm175 = vcmp.ge.s32.totalorder %v152, %v174
        %vm176 = vcmp.ge.s32.totalorder %v153, %v174
        %vm177 = vcmp.ge.s32.totalorder %v154, %v174
        %vm178 = vcmp.ge.s32.totalorder %v155, %v174
        %v179 = vstv %s173
        %vm180 = vcmp.lt.s32.totalorder %v152, %v179
        %vm181 = vcmp.lt.s32.totalorder %v153, %v179
        %vm182 = vcmp.lt.s32.totalorder %v154, %v179
        %vm183 = vcmp.lt.s32.totalorder %v155, %v179
        %vm184 = vmand %vm175, %vm180
        %vm185 = vmand %vm176, %vm181
        %vm186 = vmand %vm177, %vm182
        %vm187 = vmand %vm178, %vm183
        %vm188 = vmor %vm168, %vm184
        %vm189 = vmor %vm169, %vm185
        %vm190 = vmor %vm170, %vm186
        %vm191 = vmor %vm171, %vm187
        %s192 = sld [smem:[#allocation3 + $0x2]]
        %s193 = sld [smem:[#allocation4 + $0x2]]
        %v194 = vstv %s192
        %vm195 = vcmp.ge.s32.totalorder %v152, %v194
        %vm196 = vcmp.ge.s32.totalorder %v153, %v194
        %vm197 = vcmp.ge.s32.totalorder %v154, %v194
        %vm198 = vcmp.ge.s32.totalorder %v155, %v194
        %v199 = vstv %s193
        %vm200 = vcmp.lt.s32.totalorder %v152, %v199
        %vm201 = vcmp.lt.s32.totalorder %v153, %v199
        %vm202 = vcmp.lt.s32.totalorder %v154, %v199
        %vm203 = vcmp.lt.s32.totalorder %v155, %v199
        %vm204 = vmand %vm195, %vm200
        %vm205 = vmand %vm196, %vm201
        %vm206 = vmand %vm197, %vm202
        %vm207 = vmand %vm198, %vm203
        %vm208 = vmor %vm188, %vm204
        %vm209 = vmor %vm189, %vm205
        %vm210 = vmor %vm190, %vm206
        %vm211 = vmor %vm191, %vm207
        %v212 = vld [vmem:[%s124] sm:$0xff]
        %v214 = vcombine.high %v212, %v212
        %v216 = vunpack.c.l.s4 1983009808
        %v217 = vunpack.c.0.s8 %v216
        %v218 = vlaneseq
        %v219 = vshrl.u32 %v218, 7
        %v220 = vsub.s32 %v217, %v219
        %v221 = vrot.slane %v212, %v220
        %v223 = vunpack.c.l.s4 1983009808
        %v224 = vunpack.c.0.s8 %v223
        %v225 = vlaneseq
        %v226 = vshrl.u32 %v225, 7
        %v227 = vsub.s32 %v224, %v226
        %v228 = vrot.slane %v214, %v227
        %v229 = vcombine.high %v221, %v221
        %v230 = vcombine.high %v228, %v228
        %v235 = vsel %vm208, 0.0, %v221
        %v236 = vsel %vm209, 0.0, %v229
        %v237 = vsel %vm210, 0.0, %v228
        %v238 = vsel %vm211, 0.0, %v230
        %v243 = vcombine.low %v235, %v236
        %v244 = vcombine.low %v237, %v238
        %v246 = vunpack.c.l.s4 1983009808
        %v247 = vunpack.c.0.s8 %v246
        %v248 = vlaneseq
        %v249 = vshrl.u32 %v248, 7
        %v250 = vsub.s32 %v247, %v249
        %v251 = vrot.slane %v243, %v250
        %v253 = vunpack.c.l.s4 1983009808
        %v254 = vunpack.c.0.s8 %v253
        %v255 = vlaneseq
        %v256 = vshrl.u32 %v255, 7
        %v257 = vsub.s32 %v254, %v256
        %v258 = vrot.slane %v244, %v257
        %v259 = vcombine.low %v251, %v258
        %261 = vst [vmem:[%s142] sm:$0xff] %v259
        %s262 = sand.u32 %s62, 1
        %s263 = scalar_lea.sflag [#allocation7], %s262
        %s264 = sand.u32 %s62, 1
        %s265 = smul.addr %s264, 8
        %s266 = scalar_lea.vmem [#allocation8], %s265
        // Predicated region
        $region29: #{tpu_custom_call.1} parent=23 // pred_check
          %p267 = pneg %p72
        $region30: #{tpu_custom_call.1} parent=23 // pred_check_branch
          %269 = sbr.rel (%p267) target = $region32
        $region31: #{tpu_custom_call.1} parent=23 // pred_region
          %s270 = smul.u32 4, %s28
          %s272 = ssub.s32 128, 128
          %273 = vsyncadd %s263, %s272
          %s274 = smul.addr %s270, 32
          %s275 = scalar_lea.hbm %s3, %s274
          %s277 = sshll.u32 %s266, 4
          %s278 = int_to_ptr.vmem [resolvable:$true] %s277
          %280 = dma.vmem_to_hbm [thread:$0]  %s278, 128, %s275, %s263
        $region32: #{tpu_custom_call.1} parent=23 // pred_fallthru
          _
      $region24: #{tpu_custom_call.1} parent=5 // pred_fallthru
        _
      %p281 = scmp.le.s32.totalorder 2, %s23
      // Predicated region
      $region33: #{tpu_custom_call.1} parent=5 // pred_check
        %p282 = pneg %p281
      $region34: #{tpu_custom_call.1} parent=5 // pred_check_branch
        %284 = sbr.rel (%p282) target = $region36
      $region35: #{tpu_custom_call.1} parent=5 // pred_region
        %s285 = ssub.s32 %s23, 2
        // Predicated region
        $region37: #{tpu_custom_call.1} parent=35 // pred_check
          %p286 = pneg %p78
        $region38: #{tpu_custom_call.1} parent=35 // pred_check_branch
          %288 = sbr.rel (%p286) target = $region40
        $region39: #{tpu_custom_call.1} parent=35 // pred_region
          %s289 = sand.u32 %s63, 1
          %s290 = scalar_lea.sflag [#allocation7], %s289
          %s291 = sand.u32 %s63, 1
          %s292 = smul.addr %s291, 8
          %s293 = scalar_lea.vmem [#allocation8], %s292
          %294 = dma.done %s290, 128
        $region40: #{tpu_custom_call.1} parent=35 // pred_fallthru
          _
      $region36: #{tpu_custom_call.1} parent=5 // pred_fallthru
        _
    $region6: #{tpu_custom_call.1} parent=1 // loop_footer
      %s27 = sadd.s32 1, %s23
    $region7: #{tpu_custom_call.1} parent=1 // loop_footer_branch
      %22 = sbr.rel target = $region3
    $region8: #{tpu_custom_call.1} parent=1 // loop_exit
      _
    %295 = vsyncpa [#allocation6], 1
    %s296 = scalar_lea.sflag [#allocation6], 1
    %297 = vsyncpa %s296, 1
    %298 = vsyncpa [#allocation7], 1
    %s299 = scalar_lea.sflag [#allocation7], 1
    %300 = vsyncpa %s299, 1

</llo_original>
